<compile_context>
chip_gen: v7x
topology: tpu7x:2x2x1
jax: 0.10.0
libtpu: 0.0.40
codegen_flags: <defaults>
</compile_context>

<pallas_src>
import numpy as np
import jax
import jax.numpy as jnp
from jax.experimental import pallas as pl
from jax.experimental.pallas import tpu as pltpu


# ----------------------------------------------------------------------------
# Config (deterministic, in-script; mirrors the `configer` interface).
# ----------------------------------------------------------------------------
class Configer:
    def __init__(self):
        self.temperature = 0.1
        self.base_temperature = 0.07
        self.max_samples = 64
        self.max_views = 4
        self.memory_size = 32
        self._d = {
            ("contrast", "loss_weight"): 1.0,
            ("contrast", "use_rmi"): False,
            ("contrast", "use_lovasz"): False,
        }

    def get(self, a, b):
        return self._d[(a, b)]


def _round_up(x, m):
    return ((x + m - 1) // m) * m


# ----------------------------------------------------------------------------
# Pallas kernel 1: cross-entropy with ignore_index=-1, mean reduction.
# Layout: logits (B, C, HW) -> block (1, C, TP): channels on sublanes, pixels on
# the 128-lane axis.  Targets (B, 1, HW) int32 -> one-hot & valid built in-kernel.
# ----------------------------------------------------------------------------
def ce_loss_pallas(pred, target, row_tile=2048):
    """pred: (B, C, H, W) float32 logits, target: (B, H, W) int32 with -1 = ignore."""
    B, C, H, W = pred.shape
    HW = H * W
    x = pred.reshape(B, C, HW).astype(jnp.float32)
    t = target.reshape(B, 1, HW).astype(jnp.int32)

    tp = max(128, min(int(row_tile), _round_up(HW, 128)))
    HWp = _round_up(HW, tp)
    if HWp != HW:
        x = jnp.pad(x, ((0, 0), (0, 0), (0, HWp - HW)))
        t = jnp.pad(t, ((0, 0), (0, 0), (0, HWp - HW)), constant_values=-1)
    n_tiles = HWp // tp

    def kernel(x_ref, t_ref, sum_ref, cnt_ref):
        b = pl.program_id(0)
        i = pl.program_id(1)

        @pl.when(jnp.logical_and(b == 0, i == 0))
        def _():
            sum_ref[...] = jnp.zeros_like(sum_ref)
            cnt_ref[...] = jnp.zeros_like(cnt_ref)

        xx = x_ref[0]                                  # (C, TP) f32
        tt = t_ref[0]                                  # (1, TP) int32
        valid = (tt != -1).astype(jnp.float32)         # (1, TP)
        safe_t = jnp.where(tt < 0, 0, tt)              # (1, TP)

        m = jnp.max(xx, axis=0, keepdims=True)         # (1, TP)
        z = jnp.exp(xx - m)
        lse = jnp.log(jnp.sum(z, axis=0, keepdims=True)) + m
        cls = jax.lax.broadcasted_iota(jnp.int32, xx.shape, 0)          # class id per sublane
        picked = jnp.sum(jnp.where(cls == safe_t, xx, 0.0),
                         axis=0, keepdims=True)                         # (1, TP)
        nll = (lse - picked) * valid

        sum_ref[...] += jnp.sum(nll, axis=(0, 1), keepdims=True)
        cnt_ref[...] += jnp.sum(valid, axis=(0, 1), keepdims=True)

    total, count = pl.pallas_call(
        kernel,
        out_shape=(jax.ShapeDtypeStruct((1, 1), jnp.float32),
                   jax.ShapeDtypeStruct((1, 1), jnp.float32)),
        grid=(B, n_tiles),
        in_specs=[
            pl.BlockSpec((1, C, tp), lambda b, i: (b, 0, i)),
            pl.BlockSpec((1, 1, tp), lambda b, i: (b, 0, i)),
        ],
        out_specs=(pl.BlockSpec((1, 1), lambda b, i: (0, 0)),
                   pl.BlockSpec((1, 1), lambda b, i: (0, 0))),
        compiler_params=pltpu.CompilerParams(
            dimension_semantics=("arbitrary", "arbitrary")),
    )(x, t)
    # Guard the all-ignored case (reference would produce NaN).
    return jnp.where(count[0, 0] > 0, total[0, 0] / count[0, 0], jnp.float32(0.0))


# ----------------------------------------------------------------------------
# Pallas kernel 2: supervised-contrastive loss core (PixelContrastLoss._contrastive).
# Two-pass, N-tiled: pass 0 -> running row-max + rescaled negative exp-sum,
# pass 1 -> masked positive log-prob sum.  Masks are built in-kernel from labels.
# ----------------------------------------------------------------------------
def contrast_loss_pallas(anchor_feat, y_rows, contrast_feat, y_contrast,
                         temperature, base_temperature, tn=512):
    """anchor_feat: (M, D) f32, y_rows: (M,) int32 labels (view-major anchor rows),
    contrast_feat: (N, D) f32, y_contrast: (N,) int32 labels."""
    M, D = anchor_feat.shape
    N = contrast_feat.shape[0]

    tn = max(128, min(int(tn), _round_up(N, 128)))
    Np = _round_up(N, tn)
    n_tiles = Np // tn

    a = anchor_feat.astype(jnp.bfloat16)                 # (M, D)  bf16 -> MXU, halves DMA bytes
    ct = contrast_feat.astype(jnp.bfloat16).T            # (D, N)
    yc = y_contrast.astype(jnp.int32)
    if Np != N:
        ct = jnp.pad(ct, ((0, 0), (0, Np - N)))
        yc = jnp.pad(yc, (0, Np - N), constant_values=-2)  # never matches a real class
    ya = y_rows.astype(jnp.int32).reshape(M, 1)
    yc = yc.reshape(1, Np)

    inv_temp = 1.0 / float(temperature)
    scale = -(float(temperature) / float(base_temperature))

    def kernel(ya_ref, yc_ref, a_ref, ct_ref, o_ref, m_sc, negl_sc, psum_sc, pcnt_sc):
        p = pl.program_id(0)          # pass: 0 = max / neg-sum, 1 = pos log-prob
        j = pl.program_id(1)          # contrast-column tile

        @pl.when(jnp.logical_and(p == 0, j == 0))
        def _():
            m_sc[...] = jnp.full_like(m_sc, -jnp.inf)
            negl_sc[...] = jnp.zeros_like(negl_sc)
            psum_sc[...] = jnp.zeros_like(psum_sc)
            pcnt_sc[...] = jnp.zeros_like(pcnt_sc)

        # (M, TN) score tile; all softmax math in f32.
        s = jnp.dot(a_ref[...], ct_ref[...],
                    preferred_element_type=jnp.float32) * inv_temp
        same = (ya_ref[...] == yc_ref[...]).astype(jnp.float32)          # (M, TN)
        col = j * tn + jax.lax.broadcasted_iota(jnp.int32, (M, tn), 1)   # global column id
        row = jax.lax.broadcasted_iota(jnp.int32, (M, tn), 0)            # global row id
        valid = (col < N).astype(jnp.float32)                            # drop zero-padded columns

        @pl.when(p == 0)
        def _():
            neg_mask = (1.0 - same) * valid
            m_prev = m_sc[...]
            m_new = jnp.maximum(m_prev, jnp.max(s, axis=1, keepdims=True))
            alpha = jnp.exp(m_prev - m_new)
            negl_sc[...] = alpha * negl_sc[...] + jnp.sum(
                jnp.exp(s - m_new) * neg_mask, axis=1, keepdims=True)
            m_sc[...] = m_new

        @pl.when(p == 1)
        def _():
            # logits_mask of the reference zeroes (i, i) -> global col == global row.
            pos_mask = same * (1.0 - (col == row).astype(jnp.float32)) * valid
            logits = s - m_sc[...]
            # reference: log_prob = logits - log(exp(logits) + neg_sum)
            denom = jnp.maximum(jnp.exp(logits) + negl_sc[...], 1e-30)   # guard log(0); ref -> -inf
            log_prob = logits - jnp.log(denom)
            psum_sc[...] += jnp.sum(pos_mask * log_prob, axis=1, keepdims=True)
            pcnt_sc[...] += jnp.sum(pos_mask, axis=1, keepdims=True)

        @pl.when(jnp.logical_and(p == 1, j == n_tiles - 1))
        def _():
            cnt = pcnt_sc[...]
            # guard pos_cnt == 0 (reference would NaN); divide goes to the EUP.
            inv_cnt = pl.reciprocal(jnp.maximum(cnt, 1.0), approx=True)
            mean_lp = psum_sc[...] * inv_cnt
            loss_vec = scale * mean_lp                                    # (M, 1)
            o_ref[...] = jnp.sum(loss_vec, axis=(0, 1), keepdims=True) * (1.0 / M)

    out = pl.pallas_call(
        kernel,
        out_shape=jax.ShapeDtypeStruct((1, 1), jnp.float32),
        grid=(2, n_tiles),
        in_specs=[
            pl.BlockSpec((M, 1), lambda p, j: (0, 0)),
            pl.BlockSpec((1, tn), lambda p, j: (0, j)),
            pl.BlockSpec((M, D), lambda p, j: (0, 0)),
            pl.BlockSpec((D, tn), lambda p, j: (0, j)),
        ],
        out_specs=pl.BlockSpec((1, 1), lambda p, j: (0, 0)),
        scratch_shapes=[pltpu.VMEM((M, 1), jnp.float32),   # running row max
                        pltpu.VMEM((M, 1), jnp.float32),   # rescaled negative exp-sum
                        pltpu.VMEM((M, 1), jnp.float32),   # positive log-prob sum
                        pltpu.VMEM((M, 1), jnp.float32)],  # positive count
        compiler_params=pltpu.CompilerParams(
            dimension_semantics=("arbitrary", "arbitrary")),
    )(ya, yc, a, ct)
    return out[0, 0]


# ----------------------------------------------------------------------------
# Plain-JAX / numpy glue (resizes, argmax, data-dependent sampling).
# ----------------------------------------------------------------------------
def bilinear_resize_align_corners(x, out_hw):
    """x: (B, C, H, W) -> (B, C, oh, ow); F.interpolate bilinear, align_corners=True."""
    B, C, H, W = x.shape
    oh, ow = out_hw
    ys = jnp.linspace(0.0, H - 1.0, oh)
    xs = jnp.linspace(0.0, W - 1.0, ow)
    y0 = jnp.floor(ys).astype(jnp.int32)
    x0 = jnp.floor(xs).astype(jnp.int32)
    y1 = jnp.minimum(y0 + 1, H - 1)
    x1 = jnp.minimum(x0 + 1, W - 1)
    wy = (ys - y0.astype(jnp.float32))[None, None, :, None]
    wx = (xs - x0.astype(jnp.float32))[None, None, None, :]

    def gather(yi, xi):
        return x[:, :, yi, :][:, :, :, xi]

    v00 = gather(y0, x0)
    v01 = gather(y0, x1)
    v10 = gather(y1, x0)
    v11 = gather(y1, x1)
    return (v00 * (1 - wy) * (1 - wx) + v01 * (1 - wy) * wx
            + v10 * wy * (1 - wx) + v11 * wy * wx)


def nearest_resize_labels(labels, out_hw):
    """labels: (B, H, W) int -> (B, oh, ow); F.interpolate mode='nearest'."""
    B, H, W = labels.shape
    oh, ow = out_hw
    yi = jnp.floor(jnp.arange(oh) * (H / oh)).astype(jnp.int32)
    xi = jnp.floor(jnp.arange(ow) * (W / ow)).astype(jnp.int32)
    return labels[:, yi, :][:, :, xi]


def hard_anchor_sampling_indices(y_hat, y, max_samples, max_views,
                                 ignore_label=-1, seed=0):
    """Data-dependent selection (dynamic shapes + randperm) on small int maps (host).
    Returns (sel_b, sel_p, y_) index arrays; the feature gather happens on device."""
    rng = np.random.RandomState(seed)
    batch_size = y_hat.shape[0]
    classes, total_classes = [], 0
    for ii in range(batch_size):
        this_y = y_hat[ii]
        uniq = np.unique(this_y)
        cls = [int(c) for c in uniq
               if c != ignore_label and int(np.sum(this_y == c)) > max_views]
        classes.append(cls)
        total_classes += len(cls)
    if total_classes == 0:
        return None, None, None
    n_view = min(max_samples // total_classes, max_views)
    if n_view == 0:        # degenerate (reference would build empty anchors -> NaN)
        return None, None, None
    sel_b = np.zeros((total_classes, n_view), np.int32)
    sel_p = np.zeros((total_classes, n_view), np.int32)
    y_ = np.zeros((total_classes,), np.int32)
    ptr = 0
    for ii in range(batch_size):
        this_y_hat = y_hat[ii]
        this_y = y[ii]
        for cls_id in classes[ii]:
            hard = np.nonzero((this_y_hat == cls_id) & (this_y != cls_id))[0]
            easy = np.nonzero((this_y_hat == cls_id) & (this_y == cls_id))[0]
            nh, ne = len(hard), len(easy)
            if nh >= n_view / 2 and ne >= n_view / 2:
                nhk = n_view // 2
                nek = n_view - nhk
            elif nh >= n_view / 2:
                nek = ne
                nhk = n_view - nek
            elif ne >= n_view / 2:
                nhk = nh
                nek = n_view - nhk
            else:
                raise Exception("this should never be touched! {} {} {}".format(nh, ne, n_view))
            hard = hard[rng.permutation(nh)[:nhk]]
            easy = easy[rng.permutation(ne)[:nek]]
            idx = np.concatenate([hard, easy], axis=0)
            sel_b[ptr] = ii
            sel_p[ptr] = idx
            y_[ptr] = cls_id
            ptr += 1
    return sel_b, sel_p, y_


# ----------------------------------------------------------------------------
# Module equivalents
# ----------------------------------------------------------------------------
class PixelContrastLossPallas:
    def __init__(self, configer, contrast_tile=512):
        self.configer = configer
        self.temperature = configer.temperature
        self.base_temperature = configer.base_temperature
        self.ignore_label = -1
        self.max_samples = configer.max_samples
        self.max_views = min(configer.max_views, configer.memory_size)
        self.contrast_tile = contrast_tile

    def _contrastive(self, X_anchor, y_anchor_np, queue):
        tc, n_view, D = X_anchor.shape
        # cat(unbind(X_anchor, dim=1), dim=0) ordering: [view0 anchors, view1 anchors, ...]
        anchor_feature = jnp.transpose(X_anchor, (1, 0, 2)).reshape(tc * n_view, D)
        y_rows = jnp.asarray(np.tile(y_anchor_np, n_view).astype(np.int32))

        # _sample_negative on device: classes 1..C-1 filled in order, trailing
        # cache_size rows stay zero with label 0 (faithful to the reference quirk).
        class_num, cache_size, Dq = queue.shape
        Xq = queue[1:].reshape((class_num - 1) * cache_size, Dq)
        X_contrast = jnp.concatenate(
            [Xq, jnp.zeros((cache_size, Dq), queue.dtype)], axis=0)
        y_contrast = jnp.concatenate(
            [jnp.repeat(jnp.arange(1, class_num, dtype=jnp.int32), cache_size),
             jnp.zeros((cache_size,), jnp.int32)], axis=0)

        return contrast_loss_pallas(anchor_feature, y_rows, X_contrast, y_contrast,
                                    self.temperature, self.base_temperature,
                                    tn=self.contrast_tile)

    def __call__(self, feats, labels, predict, queue):
        B, D, He, We = feats.shape
        labels_ds = nearest_resize_labels(labels, (He, We))
        # Only the small int maps come to host for data-dependent sampling.
        labels_np = np.asarray(labels_ds).reshape(B, -1)
        predict_np = np.asarray(predict).reshape(B, -1)
        sel_b, sel_p, y_ = hard_anchor_sampling_indices(
            labels_np, predict_np, self.max_samples, self.max_views,
            ignore_label=self.ignore_label)
        if sel_b is None:
            return jnp.float32(0.0)
        feats_nhwc = jnp.transpose(feats, (0, 2, 3, 1)).reshape(B, He * We, D)
        X_anchor = feats_nhwc[jnp.asarray(sel_b), jnp.asarray(sel_p), :]   # device gather
        return self._contrastive(X_anchor, y_, queue)


class ContrastCELossPallas:
    def __init__(self, configer, ce_tile=2048, contrast_tile=512):
        self.configer = configer
        self.loss_weight = configer.get("contrast", "loss_weight")
        self.use_rmi = configer.get("contrast", "use_rmi")
        self.use_lovasz = configer.get("contrast", "use_lovasz")
        # TODO(synk): FSRMILoss / FSCELOVASZLoss branches (use_rmi/use_lovasz) not
        # implemented; FSCELoss == CrossEntropy(ignore_index=-1) reproduced here.
        self.ce_tile = ce_tile
        self.contrast_criterion = PixelContrastLossPallas(configer,
                                                          contrast_tile=contrast_tile)

    def __call__(self, preds, target, with_embed=False):
        h, w = target.shape[1], target.shape[2]
        seg = preds["seg"]
        embedding = preds["embed"]
        segment_queue = preds.get("segment_queue", None)
        pixel_queue = preds.get("pixel_queue", None)

        pred = bilinear_resize_align_corners(seg, (h, w))
        loss = ce_loss_pallas(pred, target, row_tile=self.ce_tile)

        if segment_queue is not None and pixel_queue is not None:
            queue = jnp.concatenate([segment_queue, pixel_queue], axis=1)
            predict = jnp.argmax(seg, axis=1)
            loss_contrast = self.contrast_criterion(embedding, target, predict, queue)
        else:
            loss_contrast = jnp.float32(0.0)

        if with_embed is True:
            return loss + self.loss_weight * loss_contrast
        return loss + 0.0 * loss_contrast


# ----------------------------------------------------------------------------
# Demo
# ----------------------------------------------------------------------------
if __name__ == "__main__":
    cfg = Configer()
    # Small tiles so the tiny demo exercises the multi-tile accumulation paths;
    # use 2048-8192 (CE) / 512-1024 (contrast) at production sizes.
    model = ContrastCELossPallas(cfg, ce_tile=128, contrast_tile=128)

    B, C, D = 2, 4, 32        # batch, seg classes, embedding dim
    H, W = 16, 16             # target resolution
    Hs, Ws = 8, 8             # seg / embedding resolution

    key = jax.random.PRNGKey(0)
    k1, k2, k3, k4, k5 = jax.random.split(key, 5)
    seg = jax.random.normal(k1, (B, C, Hs, Ws), dtype=jnp.float32)

    # Contrastive embeddings / memory-queue entries are L2-normalized (as in the real
    # pipeline); this also keeps the InfoNCE exponentials well-conditioned at T=0.1.
    embed = jax.random.normal(k2, (B, D, Hs, Ws), dtype=jnp.float32)
    embed = embed / (jnp.linalg.norm(embed, axis=1, keepdims=True) + 1e-6)

    target = jax.random.randint(k3, (B, H, W), 0, C).astype(jnp.int32)
    target = target.at[:, 0, 0].set(-1)  # a few ignore pixels

    segment_queue = jax.random.normal(k4, (C, cfg.memory_size, D), dtype=jnp.float32)
    segment_queue = segment_queue / (jnp.linalg.norm(segment_queue, axis=-1, keepdims=True) + 1e-6)
    pixel_queue = jax.random.normal(k5, (C, cfg.memory_size, D), dtype=jnp.float32)
    pixel_queue = pixel_queue / (jnp.linalg.norm(pixel_queue, axis=-1, keepdims=True) + 1e-6)

    preds = {
        "seg": seg,
        "embed": embed,
        "segment_queue": segment_queue,
        "pixel_queue": pixel_queue,
    }

    loss = model(preds, target, with_embed=True)
    loss = jax.block_until_ready(loss)
    assert np.isfinite(float(loss))
    print("KERNEL_OK")
</pallas_src>

<mosaic_0001>
module attributes {stable_mosaic.version = 11 : i64} {
  func.func @kernel(%arg0: i32, %arg1: i32, %arg2: memref<1x4x128xf32, #tpu.memory_space<vmem>>, %arg3: memref<1x1x128xi32, #tpu.memory_space<vmem>>, %arg4: memref<1x1xf32, #tpu.memory_space<vmem>>, %arg5: memref<1x1xf32, #tpu.memory_space<vmem>>) attributes {dimension_semantics = [#tpu.dimension_semantics<arbitrary>, #tpu.dimension_semantics<arbitrary>], iteration_bounds = array<i64: 2, 2>, scalar_prefetch = 0 : i64, scratch_operands = 0 : i64, tpu.core_type = #tpu.core_type<tc>, window_params = [{transform_indices = @transform_0, window_bounds = array<i64: 1, 4, 128>}, {transform_indices = @transform_1, window_bounds = array<i64: 1, 1, 128>}, {pipeline_mode = #tpu.pipeline_mode<synchronous>, transform_indices = @transform_2, window_bounds = array<i64: 1, 1>}, {pipeline_mode = #tpu.pipeline_mode<synchronous>, transform_indices = @transform_3, window_bounds = array<i64: 1, 1>}]} {
    %c0_i32 = arith.constant 0 : i32
    %0 = arith.cmpi eq, %arg0, %c0_i32 : i32
    %c0_i32_0 = arith.constant 0 : i32
    %1 = arith.cmpi eq, %arg1, %c0_i32_0 : i32
    %2 = arith.andi %0, %1 : i1
    %3 = arith.extui %2 : i1 to i32
    %c0_i32_1 = arith.constant 0 : i32
    %4 = arith.cmpi ne, %3, %c0_i32_1 : i32
    scf.if %4 {
      %cst_22 = arith.constant 0.000000e+00 : f32
      %51 = vector.broadcast %cst_22 : f32 to vector<1x1xf32>
      %c0_23 = arith.constant 0 : index
      %c0_24 = arith.constant 0 : index
      %52 = vector.load %arg4[%c0_23, %c0_24] : memref<1x1xf32, #tpu.memory_space<vmem>>, vector<1x1xf32>
      tpu.vector_store %arg4[%c0_23, %c0_24], %51 {strides = array<i32>} : memref<1x1xf32, #tpu.memory_space<vmem>>, vector<1x1xf32>,
      %cst_25 = arith.constant 0.000000e+00 : f32
      %53 = vector.broadcast %cst_25 : f32 to vector<1x1xf32>
      %c0_26 = arith.constant 0 : index
      %c0_27 = arith.constant 0 : index
      %54 = vector.load %arg5[%c0_26, %c0_27] : memref<1x1xf32, #tpu.memory_space<vmem>>, vector<1x1xf32>
      tpu.vector_store %arg5[%c0_26, %c0_27], %53 {strides = array<i32>} : memref<1x1xf32, #tpu.memory_space<vmem>>, vector<1x1xf32>,
    } else {
    }
    %c0 = arith.constant 0 : index
    %c0_2 = arith.constant 0 : index
    %c0_3 = arith.constant 0 : index
    %5 = vector.load %arg2[%c0, %c0_2, %c0_3] : memref<1x4x128xf32, #tpu.memory_space<vmem>>, vector<1x4x128xf32>
    %6 = vector.shape_cast %5 : vector<1x4x128xf32> to vector<4x128xf32>
    %c0_4 = arith.constant 0 : index
    %c0_5 = arith.constant 0 : index
    %c0_6 = arith.constant 0 : index
    %7 = vector.load %arg3[%c0_4, %c0_5, %c0_6] : memref<1x1x128xi32, #tpu.memory_space<vmem>>, vector<1x1x128xi32>
    %8 = vector.shape_cast %7 : vector<1x1x128xi32> to vector<1x128xi32>
    %c-1_i32 = arith.constant -1 : i32
    %9 = vector.broadcast %c-1_i32 : i32 to vector<1x128xi32>
    %10 = arith.cmpi ne, %8, %9 : vector<1x128xi32>
    %11 = arith.extui %10 : vector<1x128xi1> to vector<1x128xi32>
    %12 = arith.sitofp %11 : vector<1x128xi32> to vector<1x128xf32>
    %c0_i32_7 = arith.constant 0 : i32
    %13 = vector.broadcast %c0_i32_7 : i32 to vector<1x128xi32>
    %14 = arith.cmpi slt, %8, %13 : vector<1x128xi32>
    %c0_i32_8 = arith.constant 0 : i32
    %15 = vector.broadcast %c0_i32_8 : i32 to vector<1x128xi32>
    %16 = arith.select %14, %15, %8 : vector<1x128xi1>, vector<1x128xi32>
    %cst = arith.constant dense<0xFF800000> : vector<128xf32>
    %17 = vector.multi_reduction <maximumf>, %6, %cst [0] : vector<4x128xf32> to vector<128xf32>
    %18 = vector.shape_cast %17 : vector<128xf32> to vector<1x128xf32>
    %19 = vector.broadcast %18 : vector<1x128xf32> to vector<4x128xf32>
    %20 = arith.subf %6, %19 : vector<4x128xf32>
    %21 = math.exp %20 : vector<4x128xf32>
    %cst_9 = arith.constant dense<0.000000e+00> : vector<128xf32>
    %22 = vector.multi_reduction <add>, %21, %cst_9 [0] : vector<4x128xf32> to vector<128xf32>
    %23 = vector.shape_cast %22 : vector<128xf32> to vector<1x128xf32>
    %24 = math.log %23 : vector<1x128xf32>
    %25 = arith.addf %24, %18 : vector<1x128xf32>
    %26 = tpu.iota {dimensions = array<i32: 0>} : vector<4x128xi32>
    %27 = vector.broadcast %16 : vector<1x128xi32> to vector<4x128xi32>
    %28 = arith.cmpi eq, %26, %27 : vector<4x128xi32>
    %cst_10 = arith.constant 0.000000e+00 : f32
    %29 = vector.broadcast %cst_10 : f32 to vector<4x128xf32>
    %30 = arith.select %28, %6, %29 : vector<4x128xi1>, vector<4x128xf32>
    %cst_11 = arith.constant dense<0.000000e+00> : vector<128xf32>
    %31 = vector.multi_reduction <add>, %30, %cst_11 [0] : vector<4x128xf32> to vector<128xf32>
    %32 = vector.shape_cast %31 : vector<128xf32> to vector<1x128xf32>
    %33 = arith.subf %25, %32 : vector<1x128xf32>
    %34 = arith.mulf %33, %12 : vector<1x128xf32>
    %c0_12 = arith.constant 0 : index
    %c0_13 = arith.constant 0 : index
    %35 = vector.load %arg4[%c0_12, %c0_13] : memref<1x1xf32, #tpu.memory_space<vmem>>, vector<1x1xf32>
    %36 = vector.shape_cast %34 : vector<1x128xf32> to vector<1x1x128xf32>
    %cst_14 = arith.constant dense<0.000000e+00> : vector<1xf32>
    %37 = vector.multi_reduction <add>, %36, %cst_14 [1, 2] : vector<1x1x128xf32> to vector<1xf32>
    %38 = vector.shape_cast %37 : vector<1xf32> to vector<1x1x1xf32>
    %39 = vector.extract %38[0, 0, 0] : f32 from vector<1x1x1xf32>
    %40 = vector.broadcast %39 : f32 to vector<1x1xf32>
    %41 = arith.addf %35, %40 : vector<1x1xf32>
    %c0_15 = arith.constant 0 : index
    %c0_16 = arith.constant 0 : index
    %42 = vector.load %arg4[%c0_15, %c0_16] : memref<1x1xf32, #tpu.memory_space<vmem>>, vector<1x1xf32>
    tpu.vector_store %arg4[%c0_15, %c0_16], %41 {strides = array<i32>} : memref<1x1xf32, #tpu.memory_space<vmem>>, vector<1x1xf32>,
    %c0_17 = arith.constant 0 : index
    %c0_18 = arith.constant 0 : index
    %43 = vector.load %arg5[%c0_17, %c0_18] : memref<1x1xf32, #tpu.memory_space<vmem>>, vector<1x1xf32>
    %44 = vector.shape_cast %12 : vector<1x128xf32> to vector<1x1x128xf32>
    %cst_19 = arith.constant dense<0.000000e+00> : vector<1xf32>
    %45 = vector.multi_reduction <add>, %44, %cst_19 [1, 2] : vector<1x1x128xf32> to vector<1xf32>
    %46 = vector.shape_cast %45 : vector<1xf32> to vector<1x1x1xf32>
    %47 = vector.extract %46[0, 0, 0] : f32 from vector<1x1x1xf32>
    %48 = vector.broadcast %47 : f32 to vector<1x1xf32>
    %49 = arith.addf %43, %48 : vector<1x1xf32>
    %c0_20 = arith.constant 0 : index
    %c0_21 = arith.constant 0 : index
    %50 = vector.load %arg5[%c0_20, %c0_21] : memref<1x1xf32, #tpu.memory_space<vmem>>, vector<1x1xf32>
    tpu.vector_store %arg5[%c0_20, %c0_21], %49 {strides = array<i32>} : memref<1x1xf32, #tpu.memory_space<vmem>>, vector<1x1xf32>,
    return
  }
  func.func @transform_0(%arg0: i32, %arg1: i32) -> (i32, i32, i32) {
    %c0_i32 = arith.constant 0 : i32
    %c0_i32_0 = arith.constant 0 : i32
    return %arg0, %c0_i32, %arg1 : i32, i32, i32
  }
  func.func @transform_1(%arg0: i32, %arg1: i32) -> (i32, i32, i32) {
    %c0_i32 = arith.constant 0 : i32
    %c0_i32_0 = arith.constant 0 : i32
    return %arg0, %c0_i32, %arg1 : i32, i32, i32
  }
  func.func @transform_2(%arg0: i32, %arg1: i32) -> (i32, i32) {
    %c0_i32 = arith.constant 0 : i32
    %c0_i32_0 = arith.constant 0 : i32
    %c0_i32_1 = arith.constant 0 : i32
    return %c0_i32, %c0_i32_0 : i32, i32
  }
  func.func @transform_3(%arg0: i32, %arg1: i32) -> (i32, i32) {
    %c0_i32 = arith.constant 0 : i32
    %c0_i32_0 = arith.constant 0 : i32
    %c0_i32_1 = arith.constant 0 : i32
    return %c0_i32, %c0_i32_0 : i32, i32
  }
}

</mosaic_0001>

<llo_original>
// kernel: tpu_custom_call.1
$region0: #{tpu_custom_call.1}
  #allocation0 [shape = 'u32[]', space=smem, size = 0x4, offset = 0x4, fixed_abs, tag = 'smem constant byte address 0x4 - core index']
  #allocation1 [shape = 'u32[144,128]{1,0:T(1,128)}', space=vmem, size = 0x12000, scoped, tag = 'internal scratch']
  %s0 = inlined_call_operand.hbm [shape: f32[2,4,256], index: 0, kind: input, shape index: {}]
  %s1 = inlined_call_operand.hbm [shape: s32[2,1,256], index: 1, kind: input, shape index: {}]
  %s2 = inlined_call_operand.hbm [shape: f32[1,1], index: 2, kind: output, shape index: {0}]
  %s3 = inlined_call_operand.hbm [shape: f32[1,1], index: 3, kind: output, shape index: {1}]
  %4 = xla_tuple %s2, %s3
  %s5 = sld [smem:[#allocation0]]
  $region61: #{tpu_custom_call.1} parent=0
    _
  %s7 = ssub.s32 1, %s5
  %s8 = scalar_select 0, %s7, %s5
  $region1: #{tpu_custom_call.1} parent=0
    #allocation2 [shape = 'u8[4096]{0}', space=vmem, size = 0x1000, scoped, tag = 'input window, operand 0']
    #allocation3 [shape = 's32[2]{0}', space=sflag, size = 0x8, scoped, tag = 'scoped memory for tpu_custom_call.1']
    #allocation4 [shape = 's32[2]{0}', space=sflag, size = 0x8, scoped, tag = 'scoped memory for tpu_custom_call.1']
    #allocation5 [shape = 'u8[1024]{0}', space=vmem, size = 0x400, scoped, tag = 'input window, operand 1']
    #allocation6 [shape = 's32[2]{0}', space=sflag, size = 0x8, scoped, tag = 'scoped memory for tpu_custom_call.1']
    #allocation7 [shape = 'u8[512]{0}', space=vmem, size = 0x400, scoped, tag = 'output window, operand 0, single buffered']
    #allocation8 [shape = 'u8[512]{0}', space=vmem, size = 0x400, scoped, tag = 'output window, operand 1, single buffered']
    #allocation9 [shape = 's32[1]{0}', space=sflag, size = 0x4, scoped, tag = 'scoped memory for tpu_custom_call.1']
    %9 = vsyncpa [#allocation3], 0
    %s10 = scalar_lea.sflag [#allocation3], 1
    %11 = vsyncpa %s10, 0
    %12 = vsyncpa [#allocation6], 0
    %s13 = scalar_lea.sflag [#allocation6], 1
    %14 = vsyncpa %s13, 0
    %15 = vsyncpa [#allocation4], 0
    %16 = vsyncpa [#allocation9], 0
    loop: start=0, step=1, limit=6
    $region2: #{tpu_custom_call.1} parent=1 // loop_pre_header
      _
    $region3: #{tpu_custom_call.1} parent=1 // loop_header
      %s18 = sphi 0, %s22
      %p19 = scmp.ge.s32.totalorder %s18, 6
      %s25 = sphi 0, %s37
      %s26 = sphi 0, %s33
      %s27 = sphi 0, %s25
      %s28 = sphi 0, %s26
      %s29 = sphi 0, %s27
      %s30 = sphi 0, %s28
      %s42 = sphi 0, %s44
      %s45 = sphi 0, %s42
      %s46 = sphi 0, %s45
      %s62 = sphi 0, %s46
      %s70 = sphi 0, %s72
      %s73 = sphi 0, %s70
      %s74 = sphi 0, %s73
      %s90 = sphi 0, %s74
      %s94 = sphi 0, %s94
      %s96 = sphi 0, %s94
      %s97 = sphi 0, %s96
      %s111 = sphi 0, %s97
      %s115 = sphi 0, %s115
      %s117 = sphi 0, %s115
      %s118 = sphi 0, %s117
      %s132 = sphi 0, %s118
    $region4: #{tpu_custom_call.1} parent=1 // loop_header_branch
      %21 = sbr.rel (%p19) target = $region8
    $region5: #{tpu_custom_call.1} parent=1 // loop_body
      %s23 = ssub.s32 %s18, 1
      %s24 = ssub.s32 %s18, 2
      %s31 = sadd.s32 1, %s26
      %p32 = scmp.ge.s32.totalorder %s31, 2
      %s33 = scalar_select %p32, 0, %s31
      %s34 = sadd.s32 1, %s25
      %s35 = scalar_select %p32, %s34, %s25
      %p36 = scmp.ge.s32.totalorder %s35, 2
      %s37 = scalar_select %p36, 0, %s35
      %s38 = ssub.s32 %s25, %s37
      %s39 = ssub.s32 %s26, %s33
      %s40 = sor.u32 %s38, %s39
      %p41 = scmp.eq.s32.totalorder %s40, 0
      %s43 = sadd.s32 %s42, 1
      %s44 = scalar_select %p41, %s42, %s43
      %p47 = pneg %p41
      %p48 = scmp.eq.s32.totalorder %s18, 3
      %p49 = por %p47, %p48
      %p50 = scmp.ne.s32.totalorder %s42, %s45
      %p51 = scmp.eq.s32.totalorder %s18, 0
      %p52 = por %p50, %p51
      %p53 = scmp.ne.s32.totalorder %s42, %s45
      %p54 = scmp.eq.s32.totalorder %s23, 3
      %p55 = por %p53, %p54
      %p56 = scmp.ne.s32.totalorder %s45, %s46
      %p57 = scmp.eq.s32.totalorder %s23, 0
      %p58 = por %p56, %p57
      %p59 = scmp.ne.s32.totalorder %s45, %s46
      %p60 = scmp.eq.s32.totalorder %s24, 3
      %p61 = por %p59, %p60
      %p63 = scmp.ne.s32.totalorder %s46, %s62
      %p64 = scmp.eq.s32.totalorder %s24, 0
      %p65 = por %p63, %p64
      %s66 = ssub.s32 %s25, %s37
      %s67 = ssub.s32 %s26, %s33
      %s68 = sor.u32 %s66, %s67
      %p69 = scmp.eq.s32.totalorder %s68, 0
      %s71 = sadd.s32 %s70, 1
      %s72 = scalar_select %p69, %s70, %s71
      %p75 = pneg %p69
      %p76 = scmp.eq.s32.totalorder %s18, 3
      %p77 = por %p75, %p76
      %p78 = scmp.ne.s32.totalorder %s70, %s73
      %p79 = scmp.eq.s32.totalorder %s18, 0
      %p80 = por %p78, %p79
      %p81 = scmp.ne.s32.totalorder %s70, %s73
      %p82 = scmp.eq.s32.totalorder %s23, 3
      %p83 = por %p81, %p82
      %p84 = scmp.ne.s32.totalorder %s73, %s74
      %p85 = scmp.eq.s32.totalorder %s23, 0
      %p86 = por %p84, %p85
      %p87 = scmp.ne.s32.totalorder %s73, %s74
      %p88 = scmp.eq.s32.totalorder %s24, 3
      %p89 = por %p87, %p88
      %p91 = scmp.ne.s32.totalorder %s74, %s90
      %p92 = scmp.eq.s32.totalorder %s24, 0
      %p93 = por %p91, %p92
      %s95 = sadd.s32 %s94, 1
      %p98 = scmp.eq.s32.totalorder %s18, 3
      %p99 = scmp.ne.s32.totalorder %s94, %s96
      %p100 = scmp.eq.s32.totalorder %s18, 0
      %p101 = por %p99, %p100
      %p102 = scmp.ne.s32.totalorder %s94, %s96
      %p103 = scmp.eq.s32.totalorder %s23, 3
      %p104 = por %p102, %p103
      %p105 = scmp.ne.s32.totalorder %s96, %s97
      %p106 = scmp.eq.s32.totalorder %s23, 0
      %p107 = por %p105, %p106
      %p108 = scmp.ne.s32.totalorder %s96, %s97
      %p109 = scmp.eq.s32.totalorder %s24, 3
      %p110 = por %p108, %p109
      %p112 = scmp.ne.s32.totalorder %s97, %s111
      %p113 = scmp.eq.s32.totalorder %s24, 0
      %p114 = por %p112, %p113
      %s116 = sadd.s32 %s115, 1
      %p119 = scmp.eq.s32.totalorder %s18, 3
      %p120 = scmp.ne.s32.totalorder %s115, %s117
      %p121 = scmp.eq.s32.totalorder %s18, 0
      %p122 = por %p120, %p121
      %p123 = scmp.ne.s32.totalorder %s115, %s117
      %p124 = scmp.eq.s32.totalorder %s23, 3
      %p125 = por %p123, %p124
      %p126 = scmp.ne.s32.totalorder %s117, %s118
      %p127 = scmp.eq.s32.totalorder %s23, 0
      %p128 = por %p126, %p127
      %p129 = scmp.ne.s32.totalorder %s117, %s118
      %p130 = scmp.eq.s32.totalorder %s24, 3
      %p131 = por %p129, %p130
      %p133 = scmp.ne.s32.totalorder %s118, %s132
      %p134 = scmp.eq.s32.totalorder %s24, 0
      %p135 = por %p133, %p134
      %p136 = scmp.le.s32.totalorder 1, %s18
      %p137 = scmp.lt.s32.totalorder %s18, 5
      %p138 = pnand %p136, %p137
      %p139 = pneg %p138
      // Predicated region
      $region9: #{tpu_custom_call.1} parent=5 // pred_check
        _
      $region10: #{tpu_custom_call.1} parent=5 // pred_check_branch
        %141 = sbr.rel (%p138) target = $region12
      $region11: #{tpu_custom_call.1} parent=5 // pred_region
        %s142 = ssub.s32 %s18, 1
      $region12: #{tpu_custom_call.1} parent=5 // pred_fallthru
        _
      %p143 = scmp.lt.s32.totalorder %s18, 4
      // Predicated region
      $region13: #{tpu_custom_call.1} parent=5 // pred_check
        %p144 = pneg %p143
      $region14: #{tpu_custom_call.1} parent=5 // pred_check_branch
        %146 = sbr.rel (%p144) target = $region16
      $region15: #{tpu_custom_call.1} parent=5 // pred_region
        // Predicated region
        $region17: #{tpu_custom_call.1} parent=15 // pred_check
          %p147 = pneg %p52
        $region18: #{tpu_custom_call.1} parent=15 // pred_check_branch
          %149 = sbr.rel (%p147) target = $region20
        $region19: #{tpu_custom_call.1} parent=15 // pred_region
          %s150 = sand.u32 %s42, 1
          %s151 = scalar_lea.sflag [#allocation3], %s150
          %s152 = sand.u32 %s42, 1
          %s153 = smul.addr %s152, 4
          %s154 = scalar_lea.vmem [#allocation2], %s153
          %s156 = ssub.s32 64, 64
          %157 = vsyncadd %s151, %s156
          %s158 = smul.addr %s25, 2
          %s159 = sadd.s32 %s26, %s158
          %s160 = smul.addr %s159, 64
          %s161 = scalar_lea.hbm %s0, %s160
          %s163 = sshll.u32 %s154, 4
          %s164 = int_to_ptr.vmem [resolvable:$true] %s163
          %166 = dma.hbm_to_vmem [thread:$0]  %s161, 64, %s164, %s151
        $region20: #{tpu_custom_call.1} parent=15 // pred_fallthru
          _
        // Predicated region
        $region21: #{tpu_custom_call.1} parent=15 // pred_check
          %p167 = pneg %p80
        $region22: #{tpu_custom_call.1} parent=15 // pred_check_branch
          %169 = sbr.rel (%p167) target = $region24
        $region23: #{tpu_custom_call.1} parent=15 // pred_region
          %s170 = sand.u32 %s70, 1
          %s171 = scalar_lea.sflag [#allocation6], %s170
          %s172 = sand.u32 %s70, 1
          %s173 = scalar_lea.vmem [#allocation5], %s172
          %s175 = ssub.s32 16, 16
          %176 = vsyncadd %s171, %s175
          %s177 = smul.addr %s25, 2
          %s178 = sadd.s32 %s26, %s177
          %s179 = smul.addr %s178, 16
          %s180 = scalar_lea.hbm %s1, %s179
          %s182 = sshll.u32 %s173, 4
          %s183 = int_to_ptr.vmem [resolvable:$true] %s182
          %185 = dma.hbm_to_vmem [thread:$0]  %s180, 16, %s183, %s171
        $region24: #{tpu_custom_call.1} parent=15 // pred_fallthru
          _
      $region16: #{tpu_custom_call.1} parent=5 // pred_fallthru
        _
      %p186 = scmp.le.s32.totalorder 1, %s18
      %p187 = scmp.lt.s32.totalorder %s18, 5
      %p188 = pnand %p186, %p187
      %p189 = pneg %p188
      // Predicated region
      $region25: #{tpu_custom_call.1} parent=5 // pred_check
        _
      $region26: #{tpu_custom_call.1} parent=5 // pred_check_branch
        %191 = sbr.rel (%p188) target = $region28
      $region27: #{tpu_custom_call.1} parent=5 // pred_region
        %s192 = ssub.s32 %s18, 1
        %s193 = sand.u32 %s45, 1
        %s194 = scalar_lea.sflag [#allocation3], %s193
        %s195 = sand.u32 %s45, 1
        %s196 = smul.addr %s195, 4
        %s197 = scalar_lea.vmem [#allocation2], %s196
        // Predicated region
        $region29: #{tpu_custom_call.1} parent=27 // pred_check
          %p198 = pneg %p58
        $region30: #{tpu_custom_call.1} parent=27 // pred_check_branch
          %200 = sbr.rel (%p198) target = $region32
        $region31: #{tpu_custom_call.1} parent=27 // pred_region
          %201 = dma.done %s194, 64
        $region32: #{tpu_custom_call.1} parent=27 // pred_fallthru
          _
        %s202 = sand.u32 %s73, 1
        %s203 = scalar_lea.sflag [#allocation6], %s202
        %s204 = sand.u32 %s73, 1
        %s205 = scalar_lea.vmem [#allocation5], %s204
        // Predicated region
        $region33: #{tpu_custom_call.1} parent=27 // pred_check
          %p206 = pneg %p86
        $region34: #{tpu_custom_call.1} parent=27 // pred_check_branch
          %208 = sbr.rel (%p206) target = $region36
        $region35: #{tpu_custom_call.1} parent=27 // pred_region
          %209 = dma.done %s203, 16
        $region36: #{tpu_custom_call.1} parent=27 // pred_fallthru
          _
        %s210 = sand.u32 %s45, 1
        %s211 = scalar_lea.sflag [#allocation3], %s210
        %s212 = sand.u32 %s45, 1
        %s213 = smul.addr %s212, 4
        %s214 = scalar_lea.vmem [#allocation2], %s213
        %p215 = pneg %p58
        %p216 = pneg %p55
        %s217 = sand.u32 %s73, 1
        %s218 = scalar_lea.sflag [#allocation6], %s217
        %s219 = sand.u32 %s73, 1
        %s220 = scalar_lea.vmem [#allocation5], %s219
        %p221 = pneg %p86
        %p222 = pneg %p83
        %p223 = pneg %p107
        %p224 = pneg %p104
        %p225 = pneg %p128
        %p226 = pneg %p125
        %p227 = scmp.eq.s32.totalorder %s27, 0
        %p228 = scmp.eq.s32.totalorder %s28, 0
        %p229 = pnand %p227, %p228
        %p230 = pneg %p229
        // Predicated region
        $region37: #{tpu_custom_call.1} parent=27 // pred_check
          _
        $region38: #{tpu_custom_call.1} parent=27 // pred_check_branch
          %232 = sbr.rel (%p229) target = $region40
        $region39: #{tpu_custom_call.1} parent=27 // pred_region
          %vm233 = vcmask 0
          %234 = vst.msk [vmem:[#allocation7] sm:$0x1] %vm233, 0.0
          %235 = vst.msk [vmem:[#allocation8] sm:$0x1] %vm233, 0.0
        $region40: #{tpu_custom_call.1} parent=27 // pred_fallthru
          _
        %v236 = vld [vmem:[%s197] sm:$0xf]
        %v237 = vld [vmem:[%s205] sm:$0x1]
        %vm238 = vcmp.ne.s32.totalorder %v237, 4294967295
        %v239 = vsel %vm238, 1, 0
        %v240 = vcvt.s32.f32 %v239
        %vm241 = vcmp.lt.s32.totalorder %v237, 0
        %v242 = vsel %vm241, 0, %v237
        %vm243 = vcmask 1043456
        %v244 = vsel %vm243, %v236, -inf
        %v245 = vrot.slane %v244, 4
        %v246 = vmax.f32 %v244, %v245
        %v247 = vrot.slane %v246, 2
        %v248 = vmax.f32 %v246, %v247
        %v249 = vrot.slane %v248, 1
        %v250 = vmax.f32 %v248, %v249
        %v251 = vsub.f32 %v236, %v250
        %v252 = vmul.f32 %v251, 1.442695
        %v253 = vpow.pop %v252
        %v254 = vsel %vm243, %v253, 0.0
        %v255 = vrot.slane %v254, 4
        %v256 = vadd.f32 %v254, %v255
        %v257 = vrot.slane %v256, 2
        %v258 = vadd.f32 %v256, %v257
        %v259 = vrot.slane %v258, 1
        %v260 = vadd.f32 %v258, %v259
        %v261 = vlog2.pop %v260
        %v262 = vmul.f32 %v261, 0.6931472
        %v263 = vadd.f32 %v262, %v250
        %v264 = vlaneseq
        %v265 = vshrl.u32 %v264, 7
        %v266 = vlaneseq
        %v267 = vshrl.u32 %v266, 7
        %v268 = vsub.s32 0, %v267
        %v269 = vrot.slane %v242, %v268
        %vm270 = vcmp.eq.s32.totalorder %v265, %v269
        %v271 = vsel %vm270, %v236, 0.0
        %v272 = vsel %vm243, %v271, 0.0
        %v273 = vrot.slane %v272, 4
        %v274 = vadd.f32 %v272, %v273
        %v275 = vrot.slane %v274, 2
        %v276 = vadd.f32 %v274, %v275
        %v277 = vrot.slane %v276, 1
        %v278 = vadd.f32 %v276, %v277
        %v279 = vsub.f32 %v263, %v278
        %v280 = vmul.f32 %v279, %v240
        %v281 = vld [vmem:[#allocation7] sm:$0x1]
        %vm282 = vcmask 1040384
        %v283 = vsel %vm282, %v280, 0.0
        %284 = vadd.xlane.f32.xlu0 %v283
        %v285 = vpop.xlane.xlu0 %284
        %v286 = vrot.slane %v285, 4
        %v287 = vadd.f32 %v285, %v286
        %v288 = vrot.slane %v287, 2
        %v289 = vadd.f32 %v287, %v288
        %v290 = vrot.slane %v289, 1
        %v291 = vadd.f32 %v289, %v290
        %s292 = vtos %v291
        %v293 = vstv %s292
        %v294 = vadd.f32 %v281, %v293
        %vm295 = vcmask 0
        %296 = vst.msk [vmem:[#allocation7] sm:$0x1] %vm295, %v294
        %v297 = vld [vmem:[#allocation8] sm:$0x1]
        %v298 = vsel %vm282, %v240, 0.0
        %299 = vadd.xlane.f32.xlu0 %v298
        %v300 = vpop.xlane.xlu0 %299
        %v301 = vrot.slane %v300, 4
        %v302 = vadd.f32 %v300, %v301
        %v303 = vrot.slane %v302, 2
        %v304 = vadd.f32 %v302, %v303
        %v305 = vrot.slane %v304, 1
        %v306 = vadd.f32 %v304, %v305
        %s307 = vtos %v306
        %v308 = vstv %s307
        %v309 = vadd.f32 %v297, %v308
        %310 = vst.msk [vmem:[#allocation8] sm:$0x1] %vm295, %v309
        // Predicated region
        $region41: #{tpu_custom_call.1} parent=27 // pred_check
          %p311 = pneg %p104
        $region42: #{tpu_custom_call.1} parent=27 // pred_check_branch
          %313 = sbr.rel (%p311) target = $region44
        $region43: #{tpu_custom_call.1} parent=27 // pred_region
          %s315 = ssub.s32 16, 16
          %316 = vsyncadd [#allocation4], %s315
          %s318 = sshll.u32 [#allocation7], 4
          %s319 = int_to_ptr.vmem [resolvable:$true] %s318
          %321 = dma.vmem_to_hbm [thread:$0]  %s319, 16, %s2, [#allocation4]
        $region44: #{tpu_custom_call.1} parent=27 // pred_fallthru
          _
        // Predicated region
        $region45: #{tpu_custom_call.1} parent=27 // pred_check
          %p322 = pneg %p125
        $region46: #{tpu_custom_call.1} parent=27 // pred_check_branch
          %324 = sbr.rel (%p322) target = $region48
        $region47: #{tpu_custom_call.1} parent=27 // pred_region
          %s326 = ssub.s32 16, 16
          %327 = vsyncadd [#allocation9], %s326
          %s329 = sshll.u32 [#allocation8], 4
          %s330 = int_to_ptr.vmem [resolvable:$true] %s329
          %332 = dma.vmem_to_hbm [thread:$0]  %s330, 16, %s3, [#allocation9]
        $region48: #{tpu_custom_call.1} parent=27 // pred_fallthru
          _
        // Predicated region
        $region49: #{tpu_custom_call.1} parent=27 // pred_check
          %p333 = pneg %p104
        $region50: #{tpu_custom_call.1} parent=27 // pred_check_branch
          %335 = sbr.rel (%p333) target = $region52
        $region51: #{tpu_custom_call.1} parent=27 // pred_region
          %336 = dma.done [#allocation4], 16
        $region52: #{tpu_custom_call.1} parent=27 // pred_fallthru
          _
        // Predicated region
        $region53: #{tpu_custom_call.1} parent=27 // pred_check
          %p337 = pneg %p125
        $region54: #{tpu_custom_call.1} parent=27 // pred_check_branch
          %339 = sbr.rel (%p337) target = $region56
        $region55: #{tpu_custom_call.1} parent=27 // pred_region
          %340 = dma.done [#allocation9], 16
        $region56: #{tpu_custom_call.1} parent=27 // pred_fallthru
          _
      $region28: #{tpu_custom_call.1} parent=5 // pred_fallthru
        _
      %p341 = scmp.le.s32.totalorder 2, %s18
      // Predicated region
      $region57: #{tpu_custom_call.1} parent=5 // pred_check
        %p342 = pneg %p341
      $region58: #{tpu_custom_call.1} parent=5 // pred_check_branch
        %344 = sbr.rel (%p342) target = $region60
      $region59: #{tpu_custom_call.1} parent=5 // pred_region
        %s345 = ssub.s32 %s18, 2
      $region60: #{tpu_custom_call.1} parent=5 // pred_fallthru
        _
    $region6: #{tpu_custom_call.1} parent=1 // loop_footer
      %s22 = sadd.s32 1, %s18
    $region7: #{tpu_custom_call.1} parent=1 // loop_footer_branch
      %17 = sbr.rel target = $region3
    $region8: #{tpu_custom_call.1} parent=1 // loop_exit
      _
    %346 = vsyncpa [#allocation3], 1
    %s347 = scalar_lea.sflag [#allocation3], 1
    %348 = vsyncpa %s347, 1
    %349 = vsyncpa [#allocation6], 1
    %s350 = scalar_lea.sflag [#allocation6], 1
    %351 = vsyncpa %s350, 1
    %352 = vsyncpa [#allocation4], 1
    %s353 = scalar_lea.sflag [#allocation4], 1
    %354 = vsyncpa %s353, 1
    %355 = vsyncpa [#allocation9], 1

</llo_original>
